<compile_context>
chip_gen: v6e
topology: v6e:2x2x1
jax: 0.10.0
libtpu: 0.0.40
codegen_flags: <defaults>
</compile_context>

<pallas_src>
import functools

import jax
import jax.numpy as jnp
from jax.experimental import pallas as pl
from jax.experimental.pallas import tpu as pltpu


# ----------------------------------------------------------------------------
# Kernels
# ----------------------------------------------------------------------------

def _se_fused_kernel(x_ref, w1_ref, b1_ref, w2_ref, b2_ref, o_ref,
                     *, inv_l, b_total):
    """Single-pass: per-batch-tile mean -> FC -> ReLU -> FC -> sigmoid -> scale."""
    x = x_ref[...]                                        # (TB, C, L) in x.dtype
    tb, c, _ = x_ref.shape

    # GlobalAvgPool as sum * (1/L); f32 accumulation without a full-tile astype.
    s = jnp.sum(x, axis=-1, dtype=jnp.float32) * inv_l    # (TB, C) f32

    # Mask padded batch rows of the last block (avoid garbage into sigmoid).
    if b_total % tb != 0:
        rows = jax.lax.broadcasted_iota(jnp.int32, (tb, c), 0)
        s = jnp.where(rows < (b_total - pl.program_id(0) * tb), s, 0.0)

    # Linear(C -> H) + ReLU   (tiny; under-filled MXU is negligible by design)
    h = jnp.dot(s, w1_ref[...], preferred_element_type=jnp.float32) + b1_ref[...]
    h = jnp.maximum(h, 0.0)

    # Linear(H -> C) + Sigmoid
    z = jnp.dot(h, w2_ref[...], preferred_element_type=jnp.float32) + b2_ref[...]
    se = jax.nn.sigmoid(z)                                # (TB, C) f32

    # Channel-wise rescale; streamed tensor stays in x.dtype.
    o_ref[...] = x * se.astype(x.dtype)[:, :, None]


def _se_gates_kernel(x_ref, w1_ref, b1_ref, w2_ref, b2_ref, g_ref, acc_ref,
                     *, inv_l, l_total, tl, b_total):
    """Two-pass, pass 1: L-tiled partial sums -> SE gates (B, 1, C) in f32."""
    li = pl.program_id(1)

    @pl.when(li == 0)
    def _():
        acc_ref[...] = jnp.zeros_like(acc_ref)

    x = x_ref[...]                                        # (TB, C, TL)
    tb, c, _ = x_ref.shape

    # Mask the ragged tail of the L axis (OOB part of the last block).
    if l_total % tl != 0:
        cols = jax.lax.broadcasted_iota(jnp.int32, x.shape, 2)
        x = jnp.where(cols < (l_total - li * tl), x, jnp.zeros_like(x))

    acc_ref[...] += jnp.sum(x, axis=-1, dtype=jnp.float32)

    @pl.when(li == pl.num_programs(1) - 1)
    def _():
        s = acc_ref[...] * inv_l                          # (TB, C) f32
        if b_total % tb != 0:
            rows = jax.lax.broadcasted_iota(jnp.int32, (tb, c), 0)
            s = jnp.where(rows < (b_total - pl.program_id(0) * tb), s, 0.0)
        h = jnp.dot(s, w1_ref[...], preferred_element_type=jnp.float32) + b1_ref[...]
        h = jnp.maximum(h, 0.0)
        z = jnp.dot(h, w2_ref[...], preferred_element_type=jnp.float32) + b2_ref[...]
        g_ref[...] = jax.nn.sigmoid(z)[:, None, :]        # (TB, 1, C) f32


def _se_rescale_kernel(x_ref, g_ref, o_ref):
    """Two-pass, pass 2: L-tiled channel-wise rescale by the precomputed gates."""
    x = x_ref[...]                                        # (TB, C, TL)
    g = g_ref[...][:, 0, :].astype(x.dtype)               # (TB, C)
    o_ref[...] = x * g[:, :, None]


# ----------------------------------------------------------------------------
# Wrapper
# ----------------------------------------------------------------------------

def _vmem_capacity_bytes():
    try:
        return int(pltpu.get_tpu_info().vmem_capacity_bytes)
    except Exception:
        return 128 << 20


def squeeze_excite_block(x, w1, b1, w2, b2, *, tb=None, tl=None,
                         force_two_pass=False):
    """x: (B, C, L); w1: (H, C) [torch layout], b1: (H,); w2: (C, H), b2: (C,)."""
    B, C, L = x.shape
    H = w1.shape[0]
    itemsize = jnp.dtype(x.dtype).itemsize

    # Generation-aware budgets: v7x has 64 MiB physical VMEM, v5e/v6e 128 MiB.
    vmem_cap = _vmem_capacity_bytes()
    if vmem_cap <= (64 << 20):
        target_bytes = 7 << 19            # ~3.5 MiB per streamed x tile
        vmem_cap_limit = 36 << 20
    else:
        target_bytes = 8 << 20            # ~8 MiB per streamed x tile
        vmem_cap_limit = 96 << 20

    # Present weights as (in, out) f32 and biases as lane-friendly 2-D rows.
    w1_t = jnp.asarray(w1, jnp.float32).T             # (C, H)
    w2_t = jnp.asarray(w2, jnp.float32).T             # (H, C)
    b1_2d = jnp.asarray(b1, jnp.float32).reshape(1, H)
    b2_2d = jnp.asarray(b2, jnp.float32).reshape(1, C)
    weight_bytes = (C * H + H + H * C + C) * 4

    row_bytes = C * L * itemsize
    use_two_pass = force_two_pass or (row_bytes > target_bytes)

    cost = pl.CostEstimate(
        flops=int(2 * B * C * L + 4 * B * C * H),
        transcendentals=int(B * C),                   # sigmoid
        bytes_accessed=int((3 if use_two_pass else 2) * B * C * L * itemsize
                           + weight_bytes),
    )

    if not use_two_pass:
        # ------------------------- single-pass path -------------------------
        if tb is None:
            tb = max(1, target_bytes // max(1, row_bytes))
            # Keep >= min(B, 4) grid steps: preserves DMA/compute overlap and
            # gives both v7x TensorCores work instead of collapsing to grid=(1,).
            tb = min(tb, max(1, B // min(B, 4)))
        tb = int(max(1, min(tb, B)))
        grid = (pl.cdiv(B, tb),)

        tile_bytes = tb * row_bytes
        # Headroom for the f32 reduce upcast if the streamed dtype is sub-32-bit.
        reduce_tmp = tb * C * L * 4 if itemsize < 4 else 0
        vmem_limit = int(min(max(4 * tile_bytes + 2 * weight_bytes + reduce_tmp
                                 + (2 << 20), 8 << 20), vmem_cap_limit))

        kernel = functools.partial(_se_fused_kernel, inv_l=1.0 / L, b_total=B)
        return pl.pallas_call(
            kernel,
            out_shape=jax.ShapeDtypeStruct((B, C, L), x.dtype),
            grid=grid,
            in_specs=[
                pl.BlockSpec((tb, C, L), lambda i: (i, 0, 0)),   # streamed x tile
                pl.BlockSpec((C, H), lambda i: (0, 0)),          # VMEM-resident
                pl.BlockSpec((1, H), lambda i: (0, 0)),
                pl.BlockSpec((H, C), lambda i: (0, 0)),
                pl.BlockSpec((1, C), lambda i: (0, 0)),
            ],
            out_specs=pl.BlockSpec((tb, C, L), lambda i: (i, 0, 0)),
            compiler_params=pltpu.CompilerParams(
                dimension_semantics=("parallel",),
                vmem_limit_bytes=vmem_limit,
            ),
            cost_estimate=cost,
        )(x, w1_t, b1_2d, w2_t, b2_2d)

    # --------------------------- two-pass fallback ---------------------------
    # Pass 1: L-tiled mean + SE producing (B, 1, C) gates (x read once).
    # Pass 2: L-tiled rescale with the per-batch gate block VMEM-resident.
    tbp = 1 if tb is None else int(max(1, min(tb, B)))
    if tl is None:
        tl = max(1, target_bytes // max(1, tbp * C * itemsize))
    tl = int(tl)
    if tl >= L:
        tl = L
    else:
        tl = max(128, (tl // 128) * 128)   # lane-legal block width
        if tl > L:
            tl = L
    nb = pl.cdiv(B, tbp)
    nl = pl.cdiv(L, tl)

    x_tile_bytes = tbp * C * tl * itemsize
    reduce_tmp = tbp * C * tl * 4 if itemsize < 4 else 0
    gate_bytes = tbp * C * 4

    gates_kernel = functools.partial(_se_gates_kernel, inv_l=1.0 / L,
                                     l_total=L, tl=tl, b_total=B)
    vmem1 = int(min(max(2 * x_tile_bytes + 2 * weight_bytes + reduce_tmp
                        + 3 * gate_bytes + (2 << 20), 8 << 20), vmem_cap_limit))
    gates = pl.pallas_call(
        gates_kernel,
        out_shape=jax.ShapeDtypeStruct((B, 1, C), jnp.float32),
        grid=(nb, nl),
        in_specs=[
            pl.BlockSpec((tbp, C, tl), lambda i, l: (i, 0, l)),
            pl.BlockSpec((C, H), lambda i, l: (0, 0)),
            pl.BlockSpec((1, H), lambda i, l: (0, 0)),
            pl.BlockSpec((H, C), lambda i, l: (0, 0)),
            pl.BlockSpec((1, C), lambda i, l: (0, 0)),
        ],
        out_specs=pl.BlockSpec((tbp, 1, C), lambda i, l: (i, 0, 0)),
        scratch_shapes=[pltpu.VMEM((tbp, C), jnp.float32)],
        compiler_params=pltpu.CompilerParams(
            dimension_semantics=("parallel", "arbitrary"),
            vmem_limit_bytes=vmem1,
        ),
    )(x, w1_t, b1_2d, w2_t, b2_2d)

    vmem2 = int(min(max(4 * x_tile_bytes + 2 * gate_bytes + (2 << 20), 8 << 20),
                    vmem_cap_limit))
    return pl.pallas_call(
        _se_rescale_kernel,
        out_shape=jax.ShapeDtypeStruct((B, C, L), x.dtype),
        grid=(nb, nl),
        in_specs=[
            pl.BlockSpec((tbp, C, tl), lambda i, l: (i, 0, l)),
            pl.BlockSpec((tbp, 1, C), lambda i, l: (i, 0, 0)),
        ],
        out_specs=pl.BlockSpec((tbp, C, tl), lambda i, l: (i, 0, l)),
        compiler_params=pltpu.CompilerParams(
            dimension_semantics=("parallel", "parallel"),
            vmem_limit_bytes=vmem2,
        ),
        cost_estimate=cost,
    )(x, gates)


def squeeze_excite_ref(x, w1, b1, w2, b2):
    """Pure-JAX reference matching the PyTorch module exactly."""
    s = jnp.mean(x, axis=-1)                          # (B, C)
    h = jnp.maximum(s @ w1.T + b1, 0.0)               # (B, H)
    se = jax.nn.sigmoid(h @ w2.T + b2)                # (B, C)
    return x * se[:, :, None]


if __name__ == "__main__":
    # Small shapes: inch=16, r=4 (hidden=4), batch=4, length=256.
    B, C, L, r = 4, 16, 256, 4
    H = C // r

    key = jax.random.PRNGKey(0)
    kx, k1, k2, k3, k4 = jax.random.split(key, 5)

    x = jax.random.normal(kx, (B, C, L), dtype=jnp.float32)
    # Torch Linear shapes: weight (out, in), bias (out,).
    w1 = jax.random.normal(k1, (H, C), dtype=jnp.float32) * 0.1
    b1 = jax.random.normal(k2, (H,), dtype=jnp.float32) * 0.1
    w2 = jax.random.normal(k3, (C, H), dtype=jnp.float32) * 0.1
    b2 = jax.random.normal(k4, (C,), dtype=jnp.float32) * 0.1

    ref = squeeze_excite_ref(x, w1, b1, w2, b2)

    # 1) Single-pass path (auto tb -> multi-step batch grid, pipelining on).
    out = jax.block_until_ready(squeeze_excite_block(x, w1, b1, w2, b2))
    assert out.shape == (B, C, L)
    assert jnp.allclose(out, ref, atol=1e-5, rtol=1e-5), "mismatch (f32, fused)"

    # 2) bf16 streamed-tensor path (SE math stays f32 inside the kernel).
    x_bf16 = x.astype(jnp.bfloat16)
    out_bf16 = jax.block_until_ready(squeeze_excite_block(x_bf16, w1, b1, w2, b2))
    ref_bf16 = squeeze_excite_ref(x_bf16.astype(jnp.float32), w1, b1, w2, b2)
    assert out_bf16.dtype == jnp.bfloat16
    assert jnp.allclose(out_bf16.astype(jnp.float32), ref_bf16,
                        atol=5e-2, rtol=5e-2), "mismatch (bf16, fused)"

    # 3) Two-pass fallback, forced, with L tiled (nl=2).
    out_2p = jax.block_until_ready(
        squeeze_excite_block(x, w1, b1, w2, b2, force_two_pass=True, tl=128))
    assert jnp.allclose(out_2p, ref, atol=1e-5, rtol=1e-5), "mismatch (two-pass)"

    # 4) Two-pass fallback with a ragged L (exercises the in-kernel L mask).
    L2 = 192
    x2 = jax.random.normal(kx, (B, C, L2), dtype=jnp.float32)
    ref2 = squeeze_excite_ref(x2, w1, b1, w2, b2)
    out2 = jax.block_until_ready(
        squeeze_excite_block(x2, w1, b1, w2, b2, force_two_pass=True, tl=128))
    assert jnp.allclose(out2, ref2, atol=1e-5, rtol=1e-5), "mismatch (two-pass ragged)"

    print("KERNEL_OK")
</pallas_src>

<mosaic_0001>
module attributes {stable_mosaic.version = 11 : i64} {
  func.func @_se_fused_kernel(%arg0: i32, %arg1: memref<1x16x256xf32, #tpu.memory_space<vmem>>, %arg2: memref<16x4xf32, #tpu.memory_space<vmem>>, %arg3: memref<1x4xf32, #tpu.memory_space<vmem>>, %arg4: memref<4x16xf32, #tpu.memory_space<vmem>>, %arg5: memref<1x16xf32, #tpu.memory_space<vmem>>, %arg6: memref<1x16x256xf32, #tpu.memory_space<vmem>>) attributes {dimension_semantics = [#tpu.dimension_semantics<parallel>], iteration_bounds = array<i64: 4>, scalar_prefetch = 0 : i64, scratch_operands = 0 : i64, tpu.core_type = #tpu.core_type<tc>, window_params = [{transform_indices = @transform_0, window_bounds = array<i64: 1, 16, 256>}, {pipeline_mode = #tpu.pipeline_mode<synchronous>, transform_indices = @transform_1, window_bounds = array<i64: 16, 4>}, {pipeline_mode = #tpu.pipeline_mode<synchronous>, transform_indices = @transform_2, window_bounds = array<i64: 1, 4>}, {pipeline_mode = #tpu.pipeline_mode<synchronous>, transform_indices = @transform_3, window_bounds = array<i64: 4, 16>}, {pipeline_mode = #tpu.pipeline_mode<synchronous>, transform_indices = @transform_4, window_bounds = array<i64: 1, 16>}, {transform_indices = @transform_5, window_bounds = array<i64: 1, 16, 256>}]} {
    %c0 = arith.constant 0 : index
    %c0_0 = arith.constant 0 : index
    %c0_1 = arith.constant 0 : index
    %0 = vector.load %arg1[%c0, %c0_0, %c0_1] : memref<1x16x256xf32, #tpu.memory_space<vmem>>, vector<1x16x256xf32>
    %cst = arith.constant dense<0.000000e+00> : vector<1x16xf32>
    %1 = vector.multi_reduction <add>, %0, %cst [2] : vector<1x16x256xf32> to vector<1x16xf32>
    %cst_2 = arith.constant 3.906250e-03 : f32
    %2 = vector.broadcast %cst_2 : f32 to vector<1x16xf32>
    %3 = arith.mulf %1, %2 : vector<1x16xf32>
    %c0_3 = arith.constant 0 : index
    %c0_4 = arith.constant 0 : index
    %4 = vector.load %arg2[%c0_3, %c0_4] : memref<16x4xf32, #tpu.memory_space<vmem>>, vector<16x4xf32>
    %cst_5 = arith.constant dense<0.000000e+00> : vector<1x4xf32>
    %5 = tpu.matmul %3, %4, %cst_5 {dimension_numbers = #tpu.dot_dimension_numbers<[1], [0], [0], [1], [0, 0, 1, 1], [], []>} : vector<1x16xf32>, vector<16x4xf32>, vector<1x4xf32> -> vector<1x4xf32>
    %c0_6 = arith.constant 0 : index
    %c0_7 = arith.constant 0 : index
    %6 = vector.load %arg3[%c0_6, %c0_7] : memref<1x4xf32, #tpu.memory_space<vmem>>, vector<1x4xf32>
    %7 = arith.addf %5, %6 : vector<1x4xf32>
    %cst_8 = arith.constant 0.000000e+00 : f32
    %8 = vector.broadcast %cst_8 : f32 to vector<1x4xf32>
    %9 = arith.maximumf %7, %8 : vector<1x4xf32>
    %c0_9 = arith.constant 0 : index
    %c0_10 = arith.constant 0 : index
    %10 = vector.load %arg4[%c0_9, %c0_10] : memref<4x16xf32, #tpu.memory_space<vmem>>, vector<4x16xf32>
    %cst_11 = arith.constant dense<0.000000e+00> : vector<1x16xf32>
    %11 = tpu.matmul %9, %10, %cst_11 {dimension_numbers = #tpu.dot_dimension_numbers<[1], [0], [0], [1], [0, 0, 1, 1], [], []>} : vector<1x4xf32>, vector<4x16xf32>, vector<1x16xf32> -> vector<1x16xf32>
    %c0_12 = arith.constant 0 : index
    %c0_13 = arith.constant 0 : index
    %12 = vector.load %arg5[%c0_12, %c0_13] : memref<1x16xf32, #tpu.memory_space<vmem>>, vector<1x16xf32>
    %13 = arith.addf %11, %12 : vector<1x16xf32>
    %14 = arith.negf %13 : vector<1x16xf32>
    %15 = math.exp %14 : vector<1x16xf32>
    %cst_14 = arith.constant 1.000000e+00 : f32
    %16 = vector.broadcast %cst_14 : f32 to vector<1x16xf32>
    %17 = arith.addf %16, %15 : vector<1x16xf32>
    %18 = arith.divf %16, %17 : vector<1x16xf32>
    %19 = vector.shape_cast %18 : vector<1x16xf32> to vector<1x16x1xf32>
    %20 = vector.broadcast %19 : vector<1x16x1xf32> to vector<1x16x256xf32>
    %21 = arith.mulf %0, %20 : vector<1x16x256xf32>
    %c0_15 = arith.constant 0 : index
    %c0_16 = arith.constant 0 : index
    %c0_17 = arith.constant 0 : index
    %22 = vector.load %arg6[%c0_15, %c0_16, %c0_17] : memref<1x16x256xf32, #tpu.memory_space<vmem>>, vector<1x16x256xf32>
    tpu.vector_store %arg6[%c0_15, %c0_16, %c0_17], %21 {strides = array<i32>} : memref<1x16x256xf32, #tpu.memory_space<vmem>>, vector<1x16x256xf32>,
    return
  }
  func.func @transform_0(%arg0: i32) -> (i32, i32, i32) {
    %c0_i32 = arith.constant 0 : i32
    %c0_i32_0 = arith.constant 0 : i32
    %c0_i32_1 = arith.constant 0 : i32
    return %arg0, %c0_i32, %c0_i32_0 : i32, i32, i32
  }
  func.func @transform_1(%arg0: i32) -> (i32, i32) {
    %c0_i32 = arith.constant 0 : i32
    %c0_i32_0 = arith.constant 0 : i32
    %c0_i32_1 = arith.constant 0 : i32
    return %c0_i32, %c0_i32_0 : i32, i32
  }
  func.func @transform_2(%arg0: i32) -> (i32, i32) {
    %c0_i32 = arith.constant 0 : i32
    %c0_i32_0 = arith.constant 0 : i32
    %c0_i32_1 = arith.constant 0 : i32
    return %c0_i32, %c0_i32_0 : i32, i32
  }
  func.func @transform_3(%arg0: i32) -> (i32, i32) {
    %c0_i32 = arith.constant 0 : i32
    %c0_i32_0 = arith.constant 0 : i32
    %c0_i32_1 = arith.constant 0 : i32
    return %c0_i32, %c0_i32_0 : i32, i32
  }
  func.func @transform_4(%arg0: i32) -> (i32, i32) {
    %c0_i32 = arith.constant 0 : i32
    %c0_i32_0 = arith.constant 0 : i32
    %c0_i32_1 = arith.constant 0 : i32
    return %c0_i32, %c0_i32_0 : i32, i32
  }
  func.func @transform_5(%arg0: i32) -> (i32, i32, i32) {
    %c0_i32 = arith.constant 0 : i32
    %c0_i32_0 = arith.constant 0 : i32
    %c0_i32_1 = arith.constant 0 : i32
    return %arg0, %c0_i32, %c0_i32_0 : i32, i32, i32
  }
}

</mosaic_0001>

<llo_original>
// kernel: tpu_custom_call.1
$region0: #{tpu_custom_call.1}
  #allocation0 [shape = 'u32[]', space=smem, size = 0x4, offset = 0x4, fixed_abs, tag = 'smem constant byte address 0x4 - core index']
  #allocation1 [shape = 'u32[144,128]{1,0:T(1,128)}', space=vmem, size = 0x12000, scoped, tag = 'internal scratch']
  %s0 = inlined_call_operand.hbm [shape: f32[4,16,256], index: 0, kind: input, shape index: {}]
  %s1 = inlined_call_operand.vmem [shape: f32[16,4], index: 1, kind: input, shape index: {}]
  %s2 = inlined_call_operand.vmem [shape: f32[1,4], index: 2, kind: input, shape index: {}]
  %s3 = inlined_call_operand.vmem [shape: f32[4,16], index: 3, kind: input, shape index: {}]
  %s4 = inlined_call_operand.vmem [shape: f32[1,16], index: 4, kind: input, shape index: {}]
  %s5 = inlined_call_operand.hbm [shape: f32[4,16,256], index: 5, kind: output, shape index: {}]
  %s6 = sld [smem:[#allocation0]]
  $region57: #{tpu_custom_call.1} parent=0
    _
  %s8 = ssub.s32 1, %s6
  %s9 = scalar_select 0, %s8, %s6
  $region1: #{tpu_custom_call.1} parent=0
    #allocation2 [shape = 'u8[32768]{0}', space=vmem, size = 0x8000, scoped, tag = 'input window, operand 0']
    #allocation3 [shape = 's32[2]{0}', space=sflag, size = 0x8, scoped, tag = 'scoped memory for tpu_custom_call.1']
    #allocation4 [shape = 's32[2]{0}', space=sflag, size = 0x8, scoped, tag = 'scoped memory for tpu_custom_call.1']
    #allocation5 [shape = 'u8[32768]{0}', space=vmem, size = 0x8000, scoped, tag = 'output window, operand 0']
    %10 = vsyncpa [#allocation3], 0
    %s11 = scalar_lea.sflag [#allocation3], 1
    %12 = vsyncpa %s11, 0
    %13 = vsyncpa [#allocation4], 0
    %s14 = scalar_lea.sflag [#allocation4], 1
    %15 = vsyncpa %s14, 0
    loop: start=0, step=1, limit=6
    $region2: #{tpu_custom_call.1} parent=1 // loop_pre_header
      _
    $region3: #{tpu_custom_call.1} parent=1 // loop_header
      %s17 = sphi 0, %s21
      %p18 = scmp.ge.s32.totalorder %s17, 6
      %s27 = sphi 0, %s29
      %s30 = sphi 0, %s27
      %s31 = sphi 0, %s30
      %s47 = sphi 0, %s31
      %s51 = sphi 0, %s51
      %s53 = sphi 0, %s51
      %s54 = sphi 0, %s53
      %s68 = sphi 0, %s54
      %s72 = sphi 0, %s72
      %s74 = sphi 0, %s72
      %s75 = sphi 0, %s74
      %s89 = sphi 0, %s75
      %s93 = sphi 0, %s93
      %s95 = sphi 0, %s93
      %s96 = sphi 0, %s95
      %s110 = sphi 0, %s96
      %s114 = sphi 0, %s114
      %s116 = sphi 0, %s114
      %s117 = sphi 0, %s116
      %s131 = sphi 0, %s117
      %s137 = sphi 0, %s139
      %s140 = sphi 0, %s137
      %s141 = sphi 0, %s140
      %s157 = sphi 0, %s141
    $region4: #{tpu_custom_call.1} parent=1 // loop_header_branch
      %20 = sbr.rel (%p18) target = $region8
    $region5: #{tpu_custom_call.1} parent=1 // loop_body
      %s22 = ssub.s32 %s17, 1
      %s23 = ssub.s32 %s17, 2
      %s24 = sadd.s32 %s17, 1
      %s25 = ssub.s32 %s17, %s24
      %p26 = scmp.eq.s32.totalorder %s25, 0
      %s28 = sadd.s32 %s27, 1
      %s29 = scalar_select %p26, %s27, %s28
      %p32 = pneg %p26
      %p33 = scmp.eq.s32.totalorder %s17, 3
      %p34 = por %p32, %p33
      %p35 = scmp.ne.s32.totalorder %s27, %s30
      %p36 = scmp.eq.s32.totalorder %s17, 0
      %p37 = por %p35, %p36
      %p38 = scmp.ne.s32.totalorder %s27, %s30
      %p39 = scmp.eq.s32.totalorder %s22, 3
      %p40 = por %p38, %p39
      %p41 = scmp.ne.s32.totalorder %s30, %s31
      %p42 = scmp.eq.s32.totalorder %s22, 0
      %p43 = por %p41, %p42
      %p44 = scmp.ne.s32.totalorder %s30, %s31
      %p45 = scmp.eq.s32.totalorder %s23, 3
      %p46 = por %p44, %p45
      %p48 = scmp.ne.s32.totalorder %s31, %s47
      %p49 = scmp.eq.s32.totalorder %s23, 0
      %p50 = por %p48, %p49
      %s52 = sadd.s32 %s51, 1
      %p55 = scmp.eq.s32.totalorder %s17, 3
      %p56 = scmp.ne.s32.totalorder %s51, %s53
      %p57 = scmp.eq.s32.totalorder %s17, 0
      %p58 = por %p56, %p57
      %p59 = scmp.ne.s32.totalorder %s51, %s53
      %p60 = scmp.eq.s32.totalorder %s22, 3
      %p61 = por %p59, %p60
      %p62 = scmp.ne.s32.totalorder %s53, %s54
      %p63 = scmp.eq.s32.totalorder %s22, 0
      %p64 = por %p62, %p63
      %p65 = scmp.ne.s32.totalorder %s53, %s54
      %p66 = scmp.eq.s32.totalorder %s23, 3
      %p67 = por %p65, %p66
      %p69 = scmp.ne.s32.totalorder %s54, %s68
      %p70 = scmp.eq.s32.totalorder %s23, 0
      %p71 = por %p69, %p70
      %s73 = sadd.s32 %s72, 1
      %p76 = scmp.eq.s32.totalorder %s17, 3
      %p77 = scmp.ne.s32.totalorder %s72, %s74
      %p78 = scmp.eq.s32.totalorder %s17, 0
      %p79 = por %p77, %p78
      %p80 = scmp.ne.s32.totalorder %s72, %s74
      %p81 = scmp.eq.s32.totalorder %s22, 3
      %p82 = por %p80, %p81
      %p83 = scmp.ne.s32.totalorder %s74, %s75
      %p84 = scmp.eq.s32.totalorder %s22, 0
      %p85 = por %p83, %p84
      %p86 = scmp.ne.s32.totalorder %s74, %s75
      %p87 = scmp.eq.s32.totalorder %s23, 3
      %p88 = por %p86, %p87
      %p90 = scmp.ne.s32.totalorder %s75, %s89
      %p91 = scmp.eq.s32.totalorder %s23, 0
      %p92 = por %p90, %p91
      %s94 = sadd.s32 %s93, 1
      %p97 = scmp.eq.s32.totalorder %s17, 3
      %p98 = scmp.ne.s32.totalorder %s93, %s95
      %p99 = scmp.eq.s32.totalorder %s17, 0
      %p100 = por %p98, %p99
      %p101 = scmp.ne.s32.totalorder %s93, %s95
      %p102 = scmp.eq.s32.totalorder %s22, 3
      %p103 = por %p101, %p102
      %p104 = scmp.ne.s32.totalorder %s95, %s96
      %p105 = scmp.eq.s32.totalorder %s22, 0
      %p106 = por %p104, %p105
      %p107 = scmp.ne.s32.totalorder %s95, %s96
      %p108 = scmp.eq.s32.totalorder %s23, 3
      %p109 = por %p107, %p108
      %p111 = scmp.ne.s32.totalorder %s96, %s110
      %p112 = scmp.eq.s32.totalorder %s23, 0
      %p113 = por %p111, %p112
      %s115 = sadd.s32 %s114, 1
      %p118 = scmp.eq.s32.totalorder %s17, 3
      %p119 = scmp.ne.s32.totalorder %s114, %s116
      %p120 = scmp.eq.s32.totalorder %s17, 0
      %p121 = por %p119, %p120
      %p122 = scmp.ne.s32.totalorder %s114, %s116
      %p123 = scmp.eq.s32.totalorder %s22, 3
      %p124 = por %p122, %p123
      %p125 = scmp.ne.s32.totalorder %s116, %s117
      %p126 = scmp.eq.s32.totalorder %s22, 0
      %p127 = por %p125, %p126
      %p128 = scmp.ne.s32.totalorder %s116, %s117
      %p129 = scmp.eq.s32.totalorder %s23, 3
      %p130 = por %p128, %p129
      %p132 = scmp.ne.s32.totalorder %s117, %s131
      %p133 = scmp.eq.s32.totalorder %s23, 0
      %p134 = por %p132, %p133
      %s135 = ssub.s32 %s17, %s24
      %p136 = scmp.eq.s32.totalorder %s135, 0
      %s138 = sadd.s32 %s137, 1
      %s139 = scalar_select %p136, %s137, %s138
      %p142 = pneg %p136
      %p143 = scmp.eq.s32.totalorder %s17, 3
      %p144 = por %p142, %p143
      %p145 = scmp.ne.s32.totalorder %s137, %s140
      %p146 = scmp.eq.s32.totalorder %s17, 0
      %p147 = por %p145, %p146
      %p148 = scmp.ne.s32.totalorder %s137, %s140
      %p149 = scmp.eq.s32.totalorder %s22, 3
      %p150 = por %p148, %p149
      %p151 = scmp.ne.s32.totalorder %s140, %s141
      %p152 = scmp.eq.s32.totalorder %s22, 0
      %p153 = por %p151, %p152
      %p154 = scmp.ne.s32.totalorder %s140, %s141
      %p155 = scmp.eq.s32.totalorder %s23, 3
      %p156 = por %p154, %p155
      %p158 = scmp.ne.s32.totalorder %s141, %s157
      %p159 = scmp.eq.s32.totalorder %s23, 0
      %p160 = por %p158, %p159
      %p161 = scmp.le.s32.totalorder 1, %s17
      %p162 = scmp.lt.s32.totalorder %s17, 5
      %p163 = pnand %p161, %p162
      %p164 = pneg %p163
      // Predicated region
      $region9: #{tpu_custom_call.1} parent=5 // pred_check
        _
      $region10: #{tpu_custom_call.1} parent=5 // pred_check_branch
        %166 = sbr.rel (%p163) target = $region12
      $region11: #{tpu_custom_call.1} parent=5 // pred_region
        %s167 = ssub.s32 %s17, 1
        // Predicated region
        $region13: #{tpu_custom_call.1} parent=11 // pred_check
          %p168 = pneg %p64
        $region14: #{tpu_custom_call.1} parent=11 // pred_check_branch
          %170 = sbr.rel (%p168) target = $region16
        $region15: #{tpu_custom_call.1} parent=11 // pred_region
          _
        $region16: #{tpu_custom_call.1} parent=11 // pred_fallthru
          _
        // Predicated region
        $region17: #{tpu_custom_call.1} parent=11 // pred_check
          %p171 = pneg %p85
        $region18: #{tpu_custom_call.1} parent=11 // pred_check_branch
          %173 = sbr.rel (%p171) target = $region20
        $region19: #{tpu_custom_call.1} parent=11 // pred_region
          _
        $region20: #{tpu_custom_call.1} parent=11 // pred_fallthru
          _
        // Predicated region
        $region21: #{tpu_custom_call.1} parent=11 // pred_check
          %p174 = pneg %p106
        $region22: #{tpu_custom_call.1} parent=11 // pred_check_branch
          %176 = sbr.rel (%p174) target = $region24
        $region23: #{tpu_custom_call.1} parent=11 // pred_region
          _
        $region24: #{tpu_custom_call.1} parent=11 // pred_fallthru
          _
        // Predicated region
        $region25: #{tpu_custom_call.1} parent=11 // pred_check
          %p177 = pneg %p127
        $region26: #{tpu_custom_call.1} parent=11 // pred_check_branch
          %179 = sbr.rel (%p177) target = $region28
        $region27: #{tpu_custom_call.1} parent=11 // pred_region
          _
        $region28: #{tpu_custom_call.1} parent=11 // pred_fallthru
          _
      $region12: #{tpu_custom_call.1} parent=5 // pred_fallthru
        _
      %p180 = scmp.lt.s32.totalorder %s17, 4
      // Predicated region
      $region29: #{tpu_custom_call.1} parent=5 // pred_check
        %p181 = pneg %p180
      $region30: #{tpu_custom_call.1} parent=5 // pred_check_branch
        %183 = sbr.rel (%p181) target = $region32
      $region31: #{tpu_custom_call.1} parent=5 // pred_region
        // Predicated region
        $region33: #{tpu_custom_call.1} parent=31 // pred_check
          %p184 = pneg %p37
        $region34: #{tpu_custom_call.1} parent=31 // pred_check_branch
          %186 = sbr.rel (%p184) target = $region36
        $region35: #{tpu_custom_call.1} parent=31 // pred_region
          %s187 = sand.u32 %s27, 1
          %s188 = scalar_lea.sflag [#allocation3], %s187
          %s189 = sand.u32 %s27, 1
          %s190 = smul.addr %s189, 32
          %s191 = scalar_lea.vmem [#allocation2], %s190
          %s193 = ssub.s32 512, 512
          %194 = vsyncadd %s188, %s193
          %s195 = smul.addr %s17, 4
          %s196 = smul.addr %s195, 128
          %s197 = scalar_lea.hbm %s0, %s196
          %s198 = sshll.u32 %s191, 4
          %s199 = int_to_ptr.vmem [resolvable:$true] %s198
          %204 = dma.hbm_to_vmem [thread:$0]  %s197, 512, %s199, %s188, 256, 256, 16
        $region36: #{tpu_custom_call.1} parent=31 // pred_fallthru
          _
      $region32: #{tpu_custom_call.1} parent=5 // pred_fallthru
        _
      %p205 = scmp.le.s32.totalorder 1, %s17
      %p206 = scmp.lt.s32.totalorder %s17, 5
      %p207 = pnand %p205, %p206
      %p208 = pneg %p207
      // Predicated region
      $region37: #{tpu_custom_call.1} parent=5 // pred_check
        _
      $region38: #{tpu_custom_call.1} parent=5 // pred_check_branch
        %210 = sbr.rel (%p207) target = $region40
      $region39: #{tpu_custom_call.1} parent=5 // pred_region
        %s211 = ssub.s32 %s17, 1
        %s212 = sand.u32 %s30, 1
        %s213 = scalar_lea.sflag [#allocation3], %s212
        %s214 = sand.u32 %s30, 1
        %s215 = smul.addr %s214, 32
        %s216 = scalar_lea.vmem [#allocation2], %s215
        // Predicated region
        $region41: #{tpu_custom_call.1} parent=39 // pred_check
          %p217 = pneg %p43
        $region42: #{tpu_custom_call.1} parent=39 // pred_check_branch
          %219 = sbr.rel (%p217) target = $region44
        $region43: #{tpu_custom_call.1} parent=39 // pred_region
          %220 = dma.done %s213, 512
        $region44: #{tpu_custom_call.1} parent=39 // pred_fallthru
          _
        %s221 = sand.u32 %s30, 1
        %s222 = scalar_lea.sflag [#allocation3], %s221
        %s223 = sand.u32 %s30, 1
        %s224 = smul.addr %s223, 32
        %s225 = scalar_lea.vmem [#allocation2], %s224
        %p226 = pneg %p43
        %p227 = pneg %p40
        %p228 = pneg %p64
        %p229 = pneg %p61
        %p230 = pneg %p85
        %p231 = pneg %p82
        %p232 = pneg %p106
        %p233 = pneg %p103
        %p234 = pneg %p127
        %p235 = pneg %p124
        %p236 = pneg %p153
        %p237 = pneg %p150
        %s238 = sand.u32 %s140, 1
        %s239 = scalar_lea.sflag [#allocation4], %s238
        %s240 = sand.u32 %s140, 1
        %s241 = smul.addr %s240, 32
        %s242 = scalar_lea.vmem [#allocation5], %s241
        %v243 = vld [vmem:[%s216] sm:$0xff]
        %v244 = vld [vmem:[%s216 + $0x8] sm:$0xff]
        %v245 = vld [vmem:[%s216 + $0x10] sm:$0xff]
        %v246 = vld [vmem:[%s216 + $0x18] sm:$0xff]
        %v247 = vadd.f32 %v243, %v244
        %248 = vadd.xlane.f32.xlu0 %v247
        %v249 = vpop.xlane.xlu0 %248
        %v250 = vadd.f32 %v245, %v246
        %251 = vadd.xlane.f32.xlu0 %v250
        %v252 = vpop.xlane.xlu0 %251
        %v253 = vmul.f32 %v249, 0.00390625
        %v254 = vmul.f32 %v252, 0.00390625
        %v255 = vld [vmem:[%s1] sm:$0xff]
        %v256 = vld [vmem:[%s1 + $0x8] sm:$0xff]
        %v257 = vld [vmem:[%s2] sm:$0x1]
        %v260 = vlaneseq
        %v261 = vand.u32 %v260, 127
        %v262 = vlaneseq
        %v263 = vshrl.u32 %v262, 7
        %v264 = vsub.s32 %v261, %v263
        %v265 = vrot.slane %v253, %v264
        %v266 = vadd.s32 %v261, 4294967288
        %v267 = vlaneseq
        %v268 = vshrl.u32 %v267, 7
        %v269 = vsub.s32 %v266, %v268
        %v270 = vrot.slane %v254, %v269
        %vm271 = vcmask 130112
        %v272 = vsel %vm271, %v270, %v265
        %vm273 = vcmask 130048
        %v274 = vsel %vm273, %v272, 0
        %276 = vmatprep.subr.mxu0 0.0
        %277 = vmatpush1.msra.mxu0 0.0
        %278 = vmatprep.subr.mxu0 0.0
        %279 = vmatpush1.msra.mxu0 0.0
        %280 = vmatprep.subr.mxu0 0.0
        %281 = vmatpush1.msra.mxu0 0.0
        %282 = vmatprep.subr.mxu0 0.0
        %283 = vmatpush1.msra.mxu0 0.0
        %284 = vmatprep.subr.mxu0 0.0
        %285 = vmatpush1.msra.mxu0 0.0
        %286 = vmatprep.subr.mxu0 0.0
        %287 = vmatpush1.msra.mxu0 0.0
        %288 = vmatprep.subr.mxu0 0.0
        %289 = vmatpush1.msra.mxu0 0.0
        %290 = vmatprep.subr.mxu0 0.0
        %291 = vmatpush1.msra.mxu0 0.0
        %292 = vmatprep.subr.mxu0 0.0
        %293 = vmatpush1.msra.mxu0 0.0
        %294 = vmatprep.subr.mxu0 0.0
        %295 = vmatpush1.msra.mxu0 0.0
        %296 = vmatprep.subr.mxu0 0.0
        %297 = vmatpush1.msra.mxu0 0.0
        %298 = vmatprep.subr.mxu0 0.0
        %299 = vmatpush1.msra.mxu0 0.0
        %300 = vmatprep.subr.mxu0 0.0
        %301 = vmatpush1.msra.mxu0 0.0
        %302 = vmatprep.subr.mxu0 0.0
        %303 = vmatpush1.msra.mxu0 0.0
        %304 = vmatprep.subr.mxu0 0.0
        %305 = vmatpush1.msra.mxu0 %v256
        %306 = vmatprep.subr.mxu0 0.0
        %307 = vmatpush1.msra.mxu0 %v255
        %308 = vmatprep.subr.mxu0 0.0
        %309 = vmatpush2.msra.mxu0 0.0
        %310 = vmatprep.subr.mxu0 0.0
        %311 = vmatpush2.msra.mxu0 0.0
        %312 = vmatprep.subr.mxu0 0.0
        %313 = vmatpush2.msra.mxu0 0.0
        %314 = vmatprep.subr.mxu0 0.0
        %315 = vmatpush2.msra.mxu0 0.0
        %316 = vmatprep.subr.mxu0 0.0
        %317 = vmatpush2.msra.mxu0 0.0
        %318 = vmatprep.subr.mxu0 0.0
        %319 = vmatpush2.msra.mxu0 0.0
        %320 = vmatprep.subr.mxu0 0.0
        %321 = vmatpush2.msra.mxu0 0.0
        %322 = vmatprep.subr.mxu0 0.0
        %323 = vmatpush2.msra.mxu0 0.0
        %324 = vmatprep.subr.mxu0 0.0
        %325 = vmatpush2.msra.mxu0 0.0
        %326 = vmatprep.subr.mxu0 0.0
        %327 = vmatpush2.msra.mxu0 0.0
        %328 = vmatprep.subr.mxu0 0.0
        %329 = vmatpush2.msra.mxu0 0.0
        %330 = vmatprep.subr.mxu0 0.0
        %331 = vmatpush2.msra.mxu0 0.0
        %332 = vmatprep.subr.mxu0 0.0
        %333 = vmatpush2.msra.mxu0 0.0
        %334 = vmatprep.subr.mxu0 0.0
        %335 = vmatpush2.msra.mxu0 0.0
        %336 = vmatprep.subr.mxu0 0.0
        %337 = vmatpush2.msra.mxu0 0.0
        %338 = vmatprep.subr.mxu0 0.0
        %339 = vmatpush2.msra.mxu0 0.0
        %340 = vmatprep.mubr.f32.mxu0 0.0
        %341 = vmatmul.mubr.f32.gmra.mxu0 %v274
        %v342 = vpop.f32.mrf.mxu0
        %v343 = vadd.f32 %v257, %v342
        %v344 = vpop.f32.mrf.mxu0
        %345 = vdwg.mxu0
        %v346 = vmax.f32 %v343, 0.0
        %v347 = vld [vmem:[%s3] sm:$0xf]
        %v348 = vld [vmem:[%s4] sm:$0x1]
        %vm349 = vcmask 31744
        %v351 = vsel %vm349, %v346, 0
        %vm353 = vcmask 1043456
        %v355 = vsel %vm353, %v347, 0
        %357 = vmatprep.subr.mxu0 0.0
        %358 = vmatpush1.msra.mxu0 0.0
        %359 = vmatprep.subr.mxu0 0.0
        %360 = vmatpush1.msra.mxu0 0.0
        %361 = vmatprep.subr.mxu0 0.0
        %362 = vmatpush1.msra.mxu0 0.0
        %363 = vmatprep.subr.mxu0 0.0
        %364 = vmatpush1.msra.mxu0 0.0
        %365 = vmatprep.subr.mxu0 0.0
        %366 = vmatpush1.msra.mxu0 0.0
        %367 = vmatprep.subr.mxu0 0.0
        %368 = vmatpush1.msra.mxu0 0.0
        %369 = vmatprep.subr.mxu0 0.0
        %370 = vmatpush1.msra.mxu0 0.0
        %371 = vmatprep.subr.mxu0 0.0
        %372 = vmatpush1.msra.mxu0 0.0
        %373 = vmatprep.subr.mxu0 0.0
        %374 = vmatpush1.msra.mxu0 0.0
        %375 = vmatprep.subr.mxu0 0.0
        %376 = vmatpush1.msra.mxu0 0.0
        %377 = vmatprep.subr.mxu0 0.0
        %378 = vmatpush1.msra.mxu0 0.0
        %379 = vmatprep.subr.mxu0 0.0
        %380 = vmatpush1.msra.mxu0 0.0
        %381 = vmatprep.subr.mxu0 0.0
        %382 = vmatpush1.msra.mxu0 0.0
        %383 = vmatprep.subr.mxu0 0.0
        %384 = vmatpush1.msra.mxu0 0.0
        %385 = vmatprep.subr.mxu0 0.0
        %386 = vmatpush1.msra.mxu0 0.0
        %387 = vmatprep.subr.mxu0 0.0
        %388 = vmatpush1.msra.mxu0 %v355
        %389 = vmatprep.subr.mxu0 0.0
        %390 = vmatpush2.msra.mxu0 0.0
        %391 = vmatprep.subr.mxu0 0.0
        %392 = vmatpush2.msra.mxu0 0.0
        %393 = vmatprep.subr.mxu0 0.0
        %394 = vmatpush2.msra.mxu0 0.0
        %395 = vmatprep.subr.mxu0 0.0
        %396 = vmatpush2.msra.mxu0 0.0
        %397 = vmatprep.subr.mxu0 0.0
        %398 = vmatpush2.msra.mxu0 0.0
        %399 = vmatprep.subr.mxu0 0.0
        %400 = vmatpush2.msra.mxu0 0.0
        %401 = vmatprep.subr.mxu0 0.0
        %402 = vmatpush2.msra.mxu0 0.0
        %403 = vmatprep.subr.mxu0 0.0
        %404 = vmatpush2.msra.mxu0 0.0
        %405 = vmatprep.subr.mxu0 0.0
        %406 = vmatpush2.msra.mxu0 0.0
        %407 = vmatprep.subr.mxu0 0.0
        %408 = vmatpush2.msra.mxu0 0.0
        %409 = vmatprep.subr.mxu0 0.0
        %410 = vmatpush2.msra.mxu0 0.0
        %411 = vmatprep.subr.mxu0 0.0
        %412 = vmatpush2.msra.mxu0 0.0
        %413 = vmatprep.subr.mxu0 0.0
        %414 = vmatpush2.msra.mxu0 0.0
        %415 = vmatprep.subr.mxu0 0.0
        %416 = vmatpush2.msra.mxu0 0.0
        %417 = vmatprep.subr.mxu0 0.0
        %418 = vmatpush2.msra.mxu0 0.0
        %419 = vmatprep.subr.mxu0 0.0
        %420 = vmatpush2.msra.mxu0 0.0
        %421 = vmatprep.mubr.f32.mxu0 0.0
        %422 = vmatmul.mubr.f32.gmra.mxu0 %v351
        %v423 = vpop.f32.mrf.mxu0
        %v424 = vadd.f32 %v348, %v423
        %v425 = vpop.f32.mrf.mxu0
        %426 = vdwg.mxu0
        %v427 = vxor.u32 %v424, 2147483648
        %v428 = vmul.f32 %v427, 1.442695
        %v429 = vpow.pop %v428
        %v430 = vadd.f32 %v429, 1.0
        %v431 = vrcp.pop %v430
        %v432 = vmul.f32 1.0, %v431
        %v433 = vlaneseq
        %v434 = vshrl.u32 %v433, 7
        %v435 = vsub.s32 0, %v434
        %v436 = vrot.slane %v432, %v435
        %438 = vbcast.lane.b32.xlu0 %v436, 256
        %v439 = vpop.permute.xlu0 %438
        %s441 = sor.u32 256, 8
        %442 = vbcast.lane.b32.xlu0 %v436, %s441
        %v443 = vpop.permute.xlu0 %442
        %v444 = vmul.f32 %v243, %v439
        %v445 = vmul.f32 %v244, %v439
        %v446 = vmul.f32 %v245, %v443
        %v447 = vmul.f32 %v246, %v443
        %448 = vst [vmem:[%s242] sm:$0xff] %v444
        %449 = vst [vmem:[%s242 + $0x8] sm:$0xff] %v445
        %450 = vst [vmem:[%s242 + $0x10] sm:$0xff] %v446
        %451 = vst [vmem:[%s242 + $0x18] sm:$0xff] %v447
        %s452 = sand.u32 %s140, 1
        %s453 = scalar_lea.sflag [#allocation4], %s452
        %s454 = sand.u32 %s140, 1
        %s455 = smul.addr %s454, 32
        %s456 = scalar_lea.vmem [#allocation5], %s455
        // Predicated region
        $region45: #{tpu_custom_call.1} parent=39 // pred_check
          %p457 = pneg %p150
        $region46: #{tpu_custom_call.1} parent=39 // pred_check_branch
          %459 = sbr.rel (%p457) target = $region48
        $region47: #{tpu_custom_call.1} parent=39 // pred_region
          %s461 = ssub.s32 512, 512
          %462 = vsyncadd %s453, %s461
          %s463 = smul.addr %s22, 4
          %s464 = smul.addr %s463, 128
          %s465 = scalar_lea.hbm %s5, %s464
          %s466 = sshll.u32 %s456, 4
          %s467 = int_to_ptr.vmem [resolvable:$true] %s466
          %472 = dma.vmem_to_hbm [thread:$0]  %s467, 512, %s465, %s453, 256, 256, 16
        $region48: #{tpu_custom_call.1} parent=39 // pred_fallthru
          _
      $region40: #{tpu_custom_call.1} parent=5 // pred_fallthru
        _
      %p473 = scmp.le.s32.totalorder 2, %s17
      // Predicated region
      $region49: #{tpu_custom_call.1} parent=5 // pred_check
        %p474 = pneg %p473
      $region50: #{tpu_custom_call.1} parent=5 // pred_check_branch
        %476 = sbr.rel (%p474) target = $region52
      $region51: #{tpu_custom_call.1} parent=5 // pred_region
        %s477 = ssub.s32 %s17, 2
        // Predicated region
        $region53: #{tpu_custom_call.1} parent=51 // pred_check
          %p478 = pneg %p156
        $region54: #{tpu_custom_call.1} parent=51 // pred_check_branch
          %480 = sbr.rel (%p478) target = $region56
        $region55: #{tpu_custom_call.1} parent=51 // pred_region
          %s481 = sand.u32 %s141, 1
          %s482 = scalar_lea.sflag [#allocation4], %s481
          %s483 = sand.u32 %s141, 1
          %s484 = smul.addr %s483, 32
          %s485 = scalar_lea.vmem [#allocation5], %s484
          %486 = dma.done %s482, 512
        $region56: #{tpu_custom_call.1} parent=51 // pred_fallthru
          _
      $region52: #{tpu_custom_call.1} parent=5 // pred_fallthru
        _
    $region6: #{tpu_custom_call.1} parent=1 // loop_footer
      %s21 = sadd.s32 1, %s17
    $region7: #{tpu_custom_call.1} parent=1 // loop_footer_branch
      %16 = sbr.rel target = $region3
    $region8: #{tpu_custom_call.1} parent=1 // loop_exit
      _
    %487 = vsyncpa [#allocation3], 1
    %s488 = scalar_lea.sflag [#allocation3], 1
    %489 = vsyncpa %s488, 1
    %490 = vsyncpa [#allocation4], 1
    %s491 = scalar_lea.sflag [#allocation4], 1
    %492 = vsyncpa %s491, 1

</llo_original>
